<compile_context>
chip_gen: v7x
topology: tpu7x:2x2x1
jax: 0.10.0
libtpu: 0.0.40
codegen_flags: <defaults>
</compile_context>

<pallas_src>
import jax
import jax.numpy as jnp
from jax.experimental import pallas as pl
from jax.experimental.pallas import tpu as pltpu


def _mlp_q_kernel(x_ref, w1_ref, b1_ref, w2_ref, b2_ref, w3_ref, b3_ref, o_ref):
    """One batch tile of q = W3 @ relu(W2 @ relu(W1 @ x + b1) + b2) + b3."""
    cdt = w1_ref.dtype                                   # bf16 compute stream

    # Layer 1: single K=D_in matmul (concat fused via feature-major layout).
    a1 = jnp.dot(w1_ref[...], x_ref[...],
                 preferred_element_type=jnp.float32) + b1_ref[...]
    # Cast-then-ReLU: ReLU commutes with the bf16 round; max runs on packed
    # bf16 vregs (half the VALU passes on v6e/v7x; still correct on v5e).
    h1 = jnp.maximum(a1.astype(cdt), 0)                  # (H1, TILE_B)

    # Layer 2.
    a2 = jnp.dot(w2_ref[...], h1,
                 preferred_element_type=jnp.float32) + b2_ref[...]
    h2 = jnp.maximum(a2.astype(cdt), 0)                  # (H2, TILE_B)

    # Output layer (out_features = 1) -> lane-dense (1, TILE_B) store.
    q = jnp.dot(w3_ref[...], h2,
                preferred_element_type=jnp.float32) + b3_ref[...]
    o_ref[...] = q.astype(o_ref.dtype)


def _choose_tile_b(B, max_tile_b):
    """Lane-aligned batch tile.

    * Big tiles amortize the ~0.35us per-grid-step overhead.
    * For B >= 256 always produce >= 2 grid steps so dimension_semantics=
      ("parallel",) can shard the batch across both TensorCores on v7x.
    * No padding: the partial last block relies on Pallas's masked edge-block
      handling (output writes outside B are dropped).
    """
    if B < 2 * 128:
        return B, 1                                       # single full block
    half = -(-((B + 1) // 2) // 128) * 128                # ceil(B/2) -> x128
    tile_b = min(max_tile_b, half)
    return tile_b, pl.cdiv(B, tile_b)


def mlp_q_forward(x_t, params, *, compute_dtype=jnp.bfloat16, max_tile_b=8192):
    """Fused 3-layer MLP. x_t: (D_in, B) feature-major activations -> (B,)."""
    D_in, B = int(x_t.shape[0]), int(x_t.shape[1])

    w1, b1 = params["w1"], params["b1"]                   # (H1, D_in), (H1, 1)
    w2, b2 = params["w2"], params["b2"]                   # (H2, H1),   (H2, 1)
    w3, b3 = params["w3"], params["b3"]                   # (1,  H2),   (1,  1)

    x_t = x_t.astype(compute_dtype)
    w1c = w1.astype(compute_dtype)
    w2c = w2.astype(compute_dtype)
    w3c = w3.astype(compute_dtype)

    tile_b, n_tiles = _choose_tile_b(B, max_tile_b)

    def whole(arr):                                       # VMEM-resident weights
        return pl.BlockSpec(arr.shape, lambda i: (0, 0))

    q_t = pl.pallas_call(
        _mlp_q_kernel,
        out_shape=jax.ShapeDtypeStruct((1, B), jnp.float32),
        grid=(n_tiles,),
        in_specs=[
            pl.BlockSpec((D_in, tile_b), lambda i: (0, i)),   # activations
            whole(w1c), whole(b1), whole(w2c), whole(b2), whole(w3c), whole(b3),
        ],
        out_specs=pl.BlockSpec((1, tile_b), lambda i: (0, i)),
        compiler_params=pltpu.CompilerParams(
            dimension_semantics=("parallel",),            # megacore on v7x
            vmem_limit_bytes=32 * 1024 * 1024,            # documented headroom
        ),
    )(x_t, w1c, b1, w2c, b2, w3c, b3)

    # torch.squeeze(q, -1) in the transposed layout == take row 0.
    return q_t[0]


def mlp_q_function(obs_list, act_list, params):
    """Matches MLPQFunction.forward(obs, act) for lists of (B, d_i) arrays."""
    all_inputs = ([jnp.asarray(o, jnp.float32) for o in obs_list]
                  + [jnp.asarray(a, jnp.float32) for a in act_list])
    # One concat+transpose+cast pass builds the feature-major bf16 slab the
    # kernel consumes.  In a real pipeline this layout (and dtype) should be
    # produced upstream at buffer-creation time to avoid this extra HBM pass.
    x_t = jnp.concatenate(all_inputs, axis=-1).T
    return mlp_q_forward(x_t, params)


def init_linear(key, fan_in, fan_out):
    """PyTorch-style nn.Linear init, stored as (out_features, in_features)."""
    kw, kb = jax.random.split(key)
    bound = 1.0 / jnp.sqrt(jnp.float32(fan_in))
    w = jax.random.uniform(kw, (fan_out, fan_in), jnp.float32, -bound, bound)
    b = jax.random.uniform(kb, (fan_out, 1), jnp.float32, -bound, bound)
    return w, b


if __name__ == "__main__":
    # Small deterministic setup: 2 agents, per-agent obs_dim=4, act_dim=2.
    B = 8
    n_agents = 2
    obs_dim_per, act_dim_per = 4, 2
    obs_dim = n_agents * obs_dim_per                      # 8
    act_dim = n_agents * act_dim_per                      # 4
    hidden_sizes = (32, 32)
    sizes = [obs_dim + act_dim] + list(hidden_sizes) + [1]   # [12, 32, 32, 1]

    key = jax.random.PRNGKey(0)
    k_obs, k_act, k1, k2, k3 = jax.random.split(key, 5)

    w1, b1 = init_linear(k1, sizes[0], sizes[1])
    w2, b2 = init_linear(k2, sizes[1], sizes[2])
    w3, b3 = init_linear(k3, sizes[2], sizes[3])
    params = dict(w1=w1, b1=b1, w2=w2, b2=b2, w3=w3, b3=b3)

    def make_inputs(batch):
        obs = [jax.random.normal(jax.random.fold_in(k_obs, i),
                                 (batch, obs_dim_per), jnp.float32)
               for i in range(n_agents)]
        act = [jax.random.normal(jax.random.fold_in(k_act, i),
                                 (batch, act_dim_per), jnp.float32)
               for i in range(n_agents)]
        return obs, act

    def ref_bf16(x):
        """Mirror of the kernel's bf16 operand stream + f32 accumulation."""
        c = lambda a: a.astype(jnp.bfloat16)
        a1 = jnp.dot(c(w1), c(x).T, preferred_element_type=jnp.float32) + b1
        h1 = jnp.maximum(a1.astype(jnp.bfloat16), 0)
        a2 = jnp.dot(c(w2), h1, preferred_element_type=jnp.float32) + b2
        h2 = jnp.maximum(a2.astype(jnp.bfloat16), 0)
        return (jnp.dot(c(w3), h2, preferred_element_type=jnp.float32) + b3)[0]

    def ref_f32(x):
        """Full-f32 PyTorch semantics (loose check for the bf16 stream)."""
        h1 = jnp.maximum(x @ w1.T + b1[:, 0], 0.0)
        h2 = jnp.maximum(h1 @ w2.T + b2[:, 0], 0.0)
        return (h2 @ w3.T + b3[:, 0])[:, 0]

    # batch=8 covers the single full-extent-block path; batch=300 covers the
    # 2-tile megacore path with a masked (padding-free) partial last block.
    for batch in (B, 300):
        obs_list, act_list = make_inputs(batch)
        q = jax.block_until_ready(mlp_q_function(obs_list, act_list, params))
        assert q.shape == (batch,), q.shape

        x = jnp.concatenate(obs_list + act_list, axis=-1)
        r_bf = ref_bf16(x)
        r_f32 = ref_f32(x)
        assert jnp.allclose(q, r_bf, atol=1e-4, rtol=1e-4), (batch, q, r_bf)
        assert jnp.allclose(q, r_f32, atol=5e-2, rtol=5e-2), (batch, q, r_f32)

    print("KERNEL_OK")
</pallas_src>

<mosaic_0001>
module attributes {stable_mosaic.version = 11 : i64} {
  func.func @_mlp_q_kernel(%arg0: i32, %arg1: memref<12x8xbf16, #tpu.memory_space<vmem>>, %arg2: memref<32x12xbf16, #tpu.memory_space<vmem>>, %arg3: memref<32x1xf32, #tpu.memory_space<vmem>>, %arg4: memref<32x32xbf16, #tpu.memory_space<vmem>>, %arg5: memref<32x1xf32, #tpu.memory_space<vmem>>, %arg6: memref<1x32xbf16, #tpu.memory_space<vmem>>, %arg7: memref<1x1xf32, #tpu.memory_space<vmem>>, %arg8: memref<1x8xf32, #tpu.memory_space<vmem>>) attributes {dimension_semantics = [#tpu.dimension_semantics<parallel>], iteration_bounds = array<i64: 1>, scalar_prefetch = 0 : i64, scratch_operands = 0 : i64, tpu.core_type = #tpu.core_type<tc>, window_params = [{transform_indices = @transform_0, window_bounds = array<i64: 12, 8>}, {pipeline_mode = #tpu.pipeline_mode<synchronous>, transform_indices = @transform_1, window_bounds = array<i64: 32, 12>}, {pipeline_mode = #tpu.pipeline_mode<synchronous>, transform_indices = @transform_2, window_bounds = array<i64: 32, 1>}, {pipeline_mode = #tpu.pipeline_mode<synchronous>, transform_indices = @transform_3, window_bounds = array<i64: 32, 32>}, {pipeline_mode = #tpu.pipeline_mode<synchronous>, transform_indices = @transform_4, window_bounds = array<i64: 32, 1>}, {pipeline_mode = #tpu.pipeline_mode<synchronous>, transform_indices = @transform_5, window_bounds = array<i64: 1, 32>}, {pipeline_mode = #tpu.pipeline_mode<synchronous>, transform_indices = @transform_6, window_bounds = array<i64: 1, 1>}, {transform_indices = @transform_7, window_bounds = array<i64: 1, 8>}]} {
    %c0 = arith.constant 0 : index
    %c0_0 = arith.constant 0 : index
    %0 = vector.load %arg2[%c0, %c0_0] : memref<32x12xbf16, #tpu.memory_space<vmem>>, vector<32x12xbf16>
    %c0_1 = arith.constant 0 : index
    %c0_2 = arith.constant 0 : index
    %1 = vector.load %arg1[%c0_1, %c0_2] : memref<12x8xbf16, #tpu.memory_space<vmem>>, vector<12x8xbf16>
    %cst = arith.constant dense<0.000000e+00> : vector<32x8xf32>
    %2 = tpu.matmul %0, %1, %cst {dimension_numbers = #tpu.dot_dimension_numbers<[1], [0], [0], [1], [0, 0, 1, 1], [], []>} : vector<32x12xbf16>, vector<12x8xbf16>, vector<32x8xf32> -> vector<32x8xf32>
    %c0_3 = arith.constant 0 : index
    %c0_4 = arith.constant 0 : index
    %3 = vector.load %arg3[%c0_3, %c0_4] : memref<32x1xf32, #tpu.memory_space<vmem>>, vector<32x1xf32>
    %4 = vector.broadcast %3 : vector<32x1xf32> to vector<32x8xf32>
    %5 = arith.addf %2, %4 : vector<32x8xf32>
    %6 = arith.truncf %5 : vector<32x8xf32> to vector<32x8xbf16>
    %cst_5 = arith.constant 0.000000e+00 : bf16
    %7 = vector.broadcast %cst_5 : bf16 to vector<32x8xbf16>
    %8 = arith.maximumf %6, %7 : vector<32x8xbf16>
    %c0_6 = arith.constant 0 : index
    %c0_7 = arith.constant 0 : index
    %9 = vector.load %arg4[%c0_6, %c0_7] : memref<32x32xbf16, #tpu.memory_space<vmem>>, vector<32x32xbf16>
    %cst_8 = arith.constant dense<0.000000e+00> : vector<32x8xf32>
    %10 = tpu.matmul %9, %8, %cst_8 {dimension_numbers = #tpu.dot_dimension_numbers<[1], [0], [0], [1], [0, 0, 1, 1], [], []>} : vector<32x32xbf16>, vector<32x8xbf16>, vector<32x8xf32> -> vector<32x8xf32>
    %c0_9 = arith.constant 0 : index
    %c0_10 = arith.constant 0 : index
    %11 = vector.load %arg5[%c0_9, %c0_10] : memref<32x1xf32, #tpu.memory_space<vmem>>, vector<32x1xf32>
    %12 = vector.broadcast %11 : vector<32x1xf32> to vector<32x8xf32>
    %13 = arith.addf %10, %12 : vector<32x8xf32>
    %14 = arith.truncf %13 : vector<32x8xf32> to vector<32x8xbf16>
    %cst_11 = arith.constant 0.000000e+00 : bf16
    %15 = vector.broadcast %cst_11 : bf16 to vector<32x8xbf16>
    %16 = arith.maximumf %14, %15 : vector<32x8xbf16>
    %c0_12 = arith.constant 0 : index
    %c0_13 = arith.constant 0 : index
    %17 = vector.load %arg6[%c0_12, %c0_13] : memref<1x32xbf16, #tpu.memory_space<vmem>>, vector<1x32xbf16>
    %cst_14 = arith.constant dense<0.000000e+00> : vector<1x8xf32>
    %18 = tpu.matmul %17, %16, %cst_14 {dimension_numbers = #tpu.dot_dimension_numbers<[1], [0], [0], [1], [0, 0, 1, 1], [], []>} : vector<1x32xbf16>, vector<32x8xbf16>, vector<1x8xf32> -> vector<1x8xf32>
    %c0_15 = arith.constant 0 : index
    %c0_16 = arith.constant 0 : index
    %19 = vector.load %arg7[%c0_15, %c0_16] : memref<1x1xf32, #tpu.memory_space<vmem>>, vector<1x1xf32>
    %20 = vector.broadcast %19 : vector<1x1xf32> to vector<1x8xf32>
    %21 = arith.addf %18, %20 : vector<1x8xf32>
    %c0_17 = arith.constant 0 : index
    %c0_18 = arith.constant 0 : index
    %22 = vector.load %arg8[%c0_17, %c0_18] : memref<1x8xf32, #tpu.memory_space<vmem>>, vector<1x8xf32>
    tpu.vector_store %arg8[%c0_17, %c0_18], %21 {strides = array<i32>} : memref<1x8xf32, #tpu.memory_space<vmem>>, vector<1x8xf32>,
    return
  }
  func.func @transform_0(%arg0: i32) -> (i32, i32) {
    %c0_i32 = arith.constant 0 : i32
    %c0_i32_0 = arith.constant 0 : i32
    return %c0_i32, %arg0 : i32, i32
  }
  func.func @transform_1(%arg0: i32) -> (i32, i32) {
    %c0_i32 = arith.constant 0 : i32
    %c0_i32_0 = arith.constant 0 : i32
    %c0_i32_1 = arith.constant 0 : i32
    return %c0_i32, %c0_i32_0 : i32, i32
  }
  func.func @transform_2(%arg0: i32) -> (i32, i32) {
    %c0_i32 = arith.constant 0 : i32
    %c0_i32_0 = arith.constant 0 : i32
    %c0_i32_1 = arith.constant 0 : i32
    return %c0_i32, %c0_i32_0 : i32, i32
  }
  func.func @transform_3(%arg0: i32) -> (i32, i32) {
    %c0_i32 = arith.constant 0 : i32
    %c0_i32_0 = arith.constant 0 : i32
    %c0_i32_1 = arith.constant 0 : i32
    return %c0_i32, %c0_i32_0 : i32, i32
  }
  func.func @transform_4(%arg0: i32) -> (i32, i32) {
    %c0_i32 = arith.constant 0 : i32
    %c0_i32_0 = arith.constant 0 : i32
    %c0_i32_1 = arith.constant 0 : i32
    return %c0_i32, %c0_i32_0 : i32, i32
  }
  func.func @transform_5(%arg0: i32) -> (i32, i32) {
    %c0_i32 = arith.constant 0 : i32
    %c0_i32_0 = arith.constant 0 : i32
    %c0_i32_1 = arith.constant 0 : i32
    return %c0_i32, %c0_i32_0 : i32, i32
  }
  func.func @transform_6(%arg0: i32) -> (i32, i32) {
    %c0_i32 = arith.constant 0 : i32
    %c0_i32_0 = arith.constant 0 : i32
    %c0_i32_1 = arith.constant 0 : i32
    return %c0_i32, %c0_i32_0 : i32, i32
  }
  func.func @transform_7(%arg0: i32) -> (i32, i32) {
    %c0_i32 = arith.constant 0 : i32
    %c0_i32_0 = arith.constant 0 : i32
    return %c0_i32, %arg0 : i32, i32
  }
}

</mosaic_0001>

<llo_original>
// kernel: tpu_custom_call.1
$region0: #{tpu_custom_call.1}
  #allocation0 [shape = 'u32[]', space=smem, size = 0x4, offset = 0x4, fixed_abs, tag = 'smem constant byte address 0x4 - core index']
  #allocation1 [shape = 'u32[144,128]{1,0:T(1,128)}', space=vmem, size = 0x12000, scoped, tag = 'internal scratch']
  #allocation2 [shape = 'f32[1,1]{1,0:T(1,128)S(1)}', space=vmem, size = 0x200, scoped, tag = 'scoped memory for tpu_custom_call.1']
  %s0 = inlined_call_operand.vmem [shape: bf16[12,8], index: 0, kind: input, shape index: {}]
  %s1 = inlined_call_operand.vmem [shape: bf16[32,12], index: 1, kind: input, shape index: {}]
  %s2 = inlined_call_operand.vmem [shape: f32[32,1], index: 2, kind: input, shape index: {}]
  %s3 = inlined_call_operand.vmem [shape: bf16[32,32], index: 3, kind: input, shape index: {}]
  %s4 = inlined_call_operand.vmem [shape: f32[32,1], index: 4, kind: input, shape index: {}]
  %s5 = inlined_call_operand.vmem [shape: bf16[1,32], index: 5, kind: input, shape index: {}]
  %s6 = inlined_call_operand.<no memory space> [shape: f32[1,1], index: 6, kind: input, shape index: {}]
  %s7 = inlined_call_operand.hbm [shape: f32[1,8], index: 7, kind: output, shape index: {}]
  %s8 = sld [smem:[#allocation0]]
  $region38: #{tpu_custom_call.1} parent=0
    _
  %s10 = ssub.s32 1, %s8
  %s11 = scalar_select 0, %s10, %s8
  %v12 = vstv %s6
  %13 = vst [vmem:[#allocation2] sm:$0x1] %v12
  $region1: #{tpu_custom_call.1} parent=0
    #allocation3 [shape = 'u8[512]{0}', space=vmem, size = 0x400, scoped, tag = 'output window, operand 0, single buffered']
    #allocation4 [shape = 's32[1]{0}', space=sflag, size = 0x4, scoped, tag = 'scoped memory for tpu_custom_call.1']
    %14 = vsyncpa [#allocation4], 0
    // Predicated region
    $region2: #{tpu_custom_call.1} parent=1 // pred_check
      _
    $region3: #{tpu_custom_call.1} parent=1 // pred_check_branch
      %16 = sbr.rel (0) target = $region5
    $region4: #{tpu_custom_call.1} parent=1 // pred_region
      _
    $region5: #{tpu_custom_call.1} parent=1 // pred_fallthru
      _
    // Predicated region
    $region6: #{tpu_custom_call.1} parent=1 // pred_check
      _
    $region7: #{tpu_custom_call.1} parent=1 // pred_check_branch
      %18 = sbr.rel (0) target = $region9
    $region8: #{tpu_custom_call.1} parent=1 // pred_region
      _
    $region9: #{tpu_custom_call.1} parent=1 // pred_fallthru
      _
    // Predicated region
    $region10: #{tpu_custom_call.1} parent=1 // pred_check
      _
    $region11: #{tpu_custom_call.1} parent=1 // pred_check_branch
      %20 = sbr.rel (0) target = $region13
    $region12: #{tpu_custom_call.1} parent=1 // pred_region
      _
    $region13: #{tpu_custom_call.1} parent=1 // pred_fallthru
      _
    // Predicated region
    $region14: #{tpu_custom_call.1} parent=1 // pred_check
      _
    $region15: #{tpu_custom_call.1} parent=1 // pred_check_branch
      %22 = sbr.rel (0) target = $region17
    $region16: #{tpu_custom_call.1} parent=1 // pred_region
      _
    $region17: #{tpu_custom_call.1} parent=1 // pred_fallthru
      _
    // Predicated region
    $region18: #{tpu_custom_call.1} parent=1 // pred_check
      _
    $region19: #{tpu_custom_call.1} parent=1 // pred_check_branch
      %24 = sbr.rel (0) target = $region21
    $region20: #{tpu_custom_call.1} parent=1 // pred_region
      _
    $region21: #{tpu_custom_call.1} parent=1 // pred_fallthru
      _
    // Predicated region
    $region22: #{tpu_custom_call.1} parent=1 // pred_check
      _
    $region23: #{tpu_custom_call.1} parent=1 // pred_check_branch
      %26 = sbr.rel (0) target = $region25
    $region24: #{tpu_custom_call.1} parent=1 // pred_region
      _
    $region25: #{tpu_custom_call.1} parent=1 // pred_fallthru
      _
    // Predicated region
    $region26: #{tpu_custom_call.1} parent=1 // pred_check
      _
    $region27: #{tpu_custom_call.1} parent=1 // pred_check_branch
      %28 = sbr.rel (0) target = $region29
    $region28: #{tpu_custom_call.1} parent=1 // pred_region
      _
    $region29: #{tpu_custom_call.1} parent=1 // pred_fallthru
      _
    %v30 = vld [vmem:[%s1] sm:$0xf]
    %v31 = vld [vmem:[%s1 + $0x4] sm:$0xf]
    %v32 = vld [vmem:[%s1 + $0x8] sm:$0xf]
    %v33 = vld [vmem:[%s1 + $0xc] sm:$0xf]
    %v34 = vld [vmem:[%s0] sm:$0xf]
    %v35 = vld [vmem:[%s0 + $0x4] sm:$0x3]
    %v36 = vld [vmem:[%s2] sm:$0xff]
    %v37 = vld [vmem:[%s2 + $0x8] sm:$0xff]
    %v38 = vld [vmem:[%s2 + $0x10] sm:$0xff]
    %v39 = vld [vmem:[%s2 + $0x18] sm:$0xff]
    %41 = vset.pattern.permute.xlu0 0
    %42 = vperm.xlu0 %41, %v36
    %v43 = vpop.permute.xlu0 %42
    %46 = vset.pattern.permute.xlu0 0
    %47 = vperm.xlu0 %46, %v37
    %v48 = vpop.permute.xlu0 %47
    %51 = vset.pattern.permute.xlu0 0
    %52 = vperm.xlu0 %51, %v38
    %v53 = vpop.permute.xlu0 %52
    %56 = vset.pattern.permute.xlu0 0
    %57 = vperm.xlu0 %56, %v39
    %v58 = vpop.permute.xlu0 %57
    %v64 = vunpack.c.l.b16 %v30
    %v65 = vunpack.c.l.b16 %v31
    %v66 = vunpack.c.l.b16 %v32
    %v67 = vunpack.c.l.b16 %v33
    %v68 = vpack.c.b16 %v65, %v64
    %v69 = vpack.c.b16 %v67, %v66
    %v72 = vunpack.c.l.b16 %v34
    %v73 = vunpack.c.l.b16 %v35
    %v74 = vpack.c.b16 %v73, %v72
    %vm75 = vcmask 97280
    %v77 = vsel %vm75, %v68, 0
    %v80 = vsel %vm75, %v69, 0
    %vm82 = vcmask 1045504
    %v84 = vsel %vm82, %v74, 0
    %86 = vmatprep.subr.bf16.mxu0 0
    %87 = vmatpush1.bf16.msra.mxu0 %v84
    %88 = vmatprep.subr.bf16.mxu0 0
    %89 = vmatpush1.bf16.msra.mxu0 0
    %90 = vmatprep.subr.bf16.mxu0 0
    %91 = vmatpush1.bf16.msra.mxu0 0
    %92 = vmatprep.subr.bf16.mxu0 0
    %93 = vmatpush1.bf16.msra.mxu0 0
    %94 = vmatprep.subr.bf16.mxu0 0
    %95 = vmatpush1.bf16.msra.mxu0 0
    %96 = vmatprep.subr.bf16.mxu0 0
    %97 = vmatpush1.bf16.msra.mxu0 0
    %98 = vmatprep.subr.bf16.mxu0 0
    %99 = vmatpush1.bf16.msra.mxu0 0
    %100 = vmatprep.subr.bf16.mxu0 0
    %101 = vmatpush1.bf16.msra.mxu0 0
    %102 = vmatprep.subr.bf16.mxu0 0
    %103 = vmatpush1.bf16.msra.mxu0 0
    %104 = vmatprep.subr.bf16.mxu0 0
    %105 = vmatpush1.bf16.msra.mxu0 0
    %106 = vmatprep.subr.bf16.mxu0 0
    %107 = vmatpush1.bf16.msra.mxu0 0
    %108 = vmatprep.subr.bf16.mxu0 0
    %109 = vmatpush1.bf16.msra.mxu0 0
    %110 = vmatprep.subr.bf16.mxu0 0
    %111 = vmatpush1.bf16.msra.mxu0 0
    %112 = vmatprep.subr.bf16.mxu0 0
    %113 = vmatpush1.bf16.msra.mxu0 0
    %114 = vmatprep.subr.bf16.mxu0 0
    %115 = vmatpush1.bf16.msra.mxu0 0
    %116 = vmatprep.subr.bf16.mxu0 0
    %117 = vmatpush1.bf16.msra.mxu0 0
    %118 = vmatprep.mubr.bf16.mxu0 0
    %119 = vmatmul.mubr.bf16.gmra.mrb[0].mxu0 %v77
    %v120 = vpop.f32.mrb[0].mxu0
    %v121 = vadd.f32 %v43, %v120
    %v122 = vpop.f32.mrb[0].mxu0
    %v123 = vpop.f32.mrb[0].mxu0
    %v124 = vadd.f32 %v48, %v123
    %v125 = vpop.f32.mrb[0].mxu0
    %126 = vmatprep.mubr.bf16.mxu0 0
    %127 = vmatmul.mubr.bf16.gmra.mrb[0].mxu0 %v80
    %v128 = vpop.f32.mrb[0].mxu0
    %v129 = vadd.f32 %v53, %v128
    %v130 = vpop.f32.mrb[0].mxu0
    %v131 = vpop.f32.mrb[0].mxu0
    %v132 = vadd.f32 %v58, %v131
    %v133 = vpop.f32.mrb[0].mxu0
    %134 = vdwg.mxu0
    %v135 = vpack.c.bf16 %v124, %v121
    %v136 = vpack.c.bf16 %v132, %v129
    %v137 = vmax.bf16 %v135, 0
    %v138 = vmax.bf16 %v136, 0
    %v139 = vld [vmem:[%s3] sm:$0xf]
    %v140 = vld [vmem:[%s3 + $0x4] sm:$0xf]
    %v141 = vld [vmem:[%s3 + $0x8] sm:$0xf]
    %v142 = vld [vmem:[%s3 + $0xc] sm:$0xf]
    %v143 = vld [vmem:[%s4] sm:$0xff]
    %v144 = vld [vmem:[%s4 + $0x8] sm:$0xff]
    %v145 = vld [vmem:[%s4 + $0x10] sm:$0xff]
    %v146 = vld [vmem:[%s4 + $0x18] sm:$0xff]
    %148 = vset.pattern.permute.xlu0 0
    %149 = vperm.xlu0 %148, %v143
    %v150 = vpop.permute.xlu0 %149
    %153 = vset.pattern.permute.xlu0 0
    %154 = vperm.xlu0 %153, %v144
    %v155 = vpop.permute.xlu0 %154
    %158 = vset.pattern.permute.xlu0 0
    %159 = vperm.xlu0 %158, %v145
    %v160 = vpop.permute.xlu0 %159
    %163 = vset.pattern.permute.xlu0 0
    %164 = vperm.xlu0 %163, %v146
    %v165 = vpop.permute.xlu0 %164
    %v171 = vunpack.c.l.b16 %v139
    %v172 = vunpack.c.l.b16 %v140
    %v173 = vunpack.c.l.b16 %v141
    %v174 = vunpack.c.l.b16 %v142
    %v175 = vpack.c.b16 %v172, %v171
    %v176 = vpack.c.b16 %v174, %v173
    %vm177 = vcmask 261120
    %v179 = vsel %vm177, %v175, 0
    %v182 = vsel %vm177, %v176, 0
    %184 = vmatprep.subr.bf16.mxu0 0
    %185 = vmatpush1.bf16.msra.mxu0 %v137
    %186 = vmatprep.subr.bf16.mxu0 0
    %187 = vmatpush1.bf16.msra.mxu0 %v138
    %188 = vmatprep.subr.bf16.mxu0 0
    %189 = vmatpush1.bf16.msra.mxu0 0
    %190 = vmatprep.subr.bf16.mxu0 0
    %191 = vmatpush1.bf16.msra.mxu0 0
    %192 = vmatprep.subr.bf16.mxu0 0
    %193 = vmatpush1.bf16.msra.mxu0 0
    %194 = vmatprep.subr.bf16.mxu0 0
    %195 = vmatpush1.bf16.msra.mxu0 0
    %196 = vmatprep.subr.bf16.mxu0 0
    %197 = vmatpush1.bf16.msra.mxu0 0
    %198 = vmatprep.subr.bf16.mxu0 0
    %199 = vmatpush1.bf16.msra.mxu0 0
    %200 = vmatprep.subr.bf16.mxu0 0
    %201 = vmatpush1.bf16.msra.mxu0 0
    %202 = vmatprep.subr.bf16.mxu0 0
    %203 = vmatpush1.bf16.msra.mxu0 0
    %204 = vmatprep.subr.bf16.mxu0 0
    %205 = vmatpush1.bf16.msra.mxu0 0
    %206 = vmatprep.subr.bf16.mxu0 0
    %207 = vmatpush1.bf16.msra.mxu0 0
    %208 = vmatprep.subr.bf16.mxu0 0
    %209 = vmatpush1.bf16.msra.mxu0 0
    %210 = vmatprep.subr.bf16.mxu0 0
    %211 = vmatpush1.bf16.msra.mxu0 0
    %212 = vmatprep.subr.bf16.mxu0 0
    %213 = vmatpush1.bf16.msra.mxu0 0
    %214 = vmatprep.subr.bf16.mxu0 0
    %215 = vmatpush1.bf16.msra.mxu0 0
    %216 = vmatprep.mubr.bf16.mxu0 0
    %217 = vmatmul.mubr.bf16.gmra.mrb[0].mxu0 %v179
    %v218 = vpop.f32.mrb[0].mxu0
    %v219 = vadd.f32 %v150, %v218
    %v220 = vpop.f32.mrb[0].mxu0
    %v221 = vpop.f32.mrb[0].mxu0
    %v222 = vadd.f32 %v155, %v221
    %v223 = vpop.f32.mrb[0].mxu0
    %224 = vmatprep.mubr.bf16.mxu0 0
    %225 = vmatmul.mubr.bf16.gmra.mrb[0].mxu0 %v182
    %v226 = vpop.f32.mrb[0].mxu0
    %v227 = vadd.f32 %v160, %v226
    %v228 = vpop.f32.mrb[0].mxu0
    %v229 = vpop.f32.mrb[0].mxu0
    %v230 = vadd.f32 %v165, %v229
    %v231 = vpop.f32.mrb[0].mxu0
    %232 = vdwg.mxu0
    %v233 = vpack.c.bf16 %v222, %v219
    %v234 = vpack.c.bf16 %v230, %v227
    %v235 = vmax.bf16 %v233, 0
    %v236 = vmax.bf16 %v234, 0
    %v237 = vld [vmem:[%s5] sm:$0x1]
    %v238 = vld [vmem:[#allocation2] sm:$0x1]
    %240 = vset.pattern.permute.xlu0 0
    %241 = vperm.xlu0 %240, %v238
    %v242 = vpop.permute.xlu0 %241
    %v244 = vlaneseq
    %v245 = vshrl.u32 %v244, 7
    %v246 = vsub.s32 0, %v245
    %v247 = vrot.slane %v242, %v246
    %v249 = vsel %vm177, %v237, 0
    %251 = vmatprep.subr.bf16.mxu0 0
    %252 = vmatpush1.bf16.msra.mxu0 %v235
    %253 = vmatprep.subr.bf16.mxu0 0
    %254 = vmatpush1.bf16.msra.mxu0 %v236
    %255 = vmatprep.subr.bf16.mxu0 0
    %256 = vmatpush1.bf16.msra.mxu0 0
    %257 = vmatprep.subr.bf16.mxu0 0
    %258 = vmatpush1.bf16.msra.mxu0 0
    %259 = vmatprep.subr.bf16.mxu0 0
    %260 = vmatpush1.bf16.msra.mxu0 0
    %261 = vmatprep.subr.bf16.mxu0 0
    %262 = vmatpush1.bf16.msra.mxu0 0
    %263 = vmatprep.subr.bf16.mxu0 0
    %264 = vmatpush1.bf16.msra.mxu0 0
    %265 = vmatprep.subr.bf16.mxu0 0
    %266 = vmatpush1.bf16.msra.mxu0 0
    %267 = vmatprep.subr.bf16.mxu0 0
    %268 = vmatpush1.bf16.msra.mxu0 0
    %269 = vmatprep.subr.bf16.mxu0 0
    %270 = vmatpush1.bf16.msra.mxu0 0
    %271 = vmatprep.subr.bf16.mxu0 0
    %272 = vmatpush1.bf16.msra.mxu0 0
    %273 = vmatprep.subr.bf16.mxu0 0
    %274 = vmatpush1.bf16.msra.mxu0 0
    %275 = vmatprep.subr.bf16.mxu0 0
    %276 = vmatpush1.bf16.msra.mxu0 0
    %277 = vmatprep.subr.bf16.mxu0 0
    %278 = vmatpush1.bf16.msra.mxu0 0
    %279 = vmatprep.subr.bf16.mxu0 0
    %280 = vmatpush1.bf16.msra.mxu0 0
    %281 = vmatprep.subr.bf16.mxu0 0
    %282 = vmatpush1.bf16.msra.mxu0 0
    %283 = vmatprep.mubr.bf16.mxu0 0
    %284 = vmatmul.mubr.bf16.gmra.mrb[0].mxu0 %v249
    %v285 = vpop.f32.mrb[0].mxu0
    %v286 = vadd.f32 %v247, %v285
    %v287 = vpop.f32.mrb[0].mxu0
    %v288 = vpop.f32.mrb[0].mxu0
    %v289 = vpop.f32.mrb[0].mxu0
    %290 = vdwg.mxu0
    %vm291 = vcmask 57344
    %292 = vst.msk [vmem:[#allocation3] sm:$0x1] %vm291, %v286
    // Predicated region
    $region30: #{tpu_custom_call.1} parent=1 // pred_check
      _
    $region31: #{tpu_custom_call.1} parent=1 // pred_check_branch
      %294 = sbr.rel (0) target = $region33
    $region32: #{tpu_custom_call.1} parent=1 // pred_region
      %s296 = ssub.s32 16, 16
      %297 = vsyncadd [#allocation4], %s296
      %s299 = sshll.u32 [#allocation3], 4
      %s300 = int_to_ptr.vmem [resolvable:$true] %s299
      %302 = dma.vmem_to_hbm [thread:$0]  %s300, 16, %s7, [#allocation4]
    $region33: #{tpu_custom_call.1} parent=1 // pred_fallthru
      _
    // Predicated region
    $region34: #{tpu_custom_call.1} parent=1 // pred_check
      _
    $region35: #{tpu_custom_call.1} parent=1 // pred_check_branch
      %304 = sbr.rel (0) target = $region37
    $region36: #{tpu_custom_call.1} parent=1 // pred_region
      %305 = dma.done [#allocation4], 16
    $region37: #{tpu_custom_call.1} parent=1 // pred_fallthru
      _
    %306 = vsyncpa [#allocation4], 1

</llo_original>
